<compile_context>
chip_gen: v7x
topology: tpu7x:2x2x1
jax: 0.10.0
libtpu: 0.0.40
codegen_flags: <defaults>
</compile_context>

<pallas_src>
import functools
import math

import jax
import jax.numpy as jnp
from jax.experimental import pallas as pl
from jax.experimental.pallas import tpu as pltpu

_INV_SQRT2 = 1.0 / math.sqrt(2.0)


def _gelu(x, approx):
    if approx:
        return jax.nn.gelu(x, approximate=True)   # tanh approx -> EUP
    return 0.5 * x * (1.0 + jax.lax.erf(x * _INV_SQRT2))  # exact PyTorch F.gelu


# ----------------------------------------------------------------------------
# Kernels
# ----------------------------------------------------------------------------
def _packed_kernel(scale_ref,                      # SMEM (1,) f32: sigmoid(scale+1)
                   real_ref, imag_ref,             # VMEM (T, C)
                   w1_ref, b1_ref,                 # VMEM (3C, D), (1, D)
                   wc_ref, bc_ref,                 # VMEM (D, D), (1, D)
                   out_ref,                        # VMEM (T, D)
                   *, approx_gelu):
    """Small-C path: first layer packed into a single K=3C GEMM."""
    real = real_ref[...].astype(jnp.float32)
    imag = imag_ref[...].astype(jnp.float32)
    eps = jnp.float32(1e-6)

    sq = real * real + imag * imag + eps
    mag = jnp.sqrt(sq)                      # EUP, exact (matches reference)
    inv_mag = jax.lax.rsqrt(sq)             # EUP; ULP-close to 1/mag

    # X1 = [magnitude | norm_real | norm_imag]  (one lane-concat, one GEMM)
    x1 = jnp.concatenate([mag, real * inv_mag, imag * inv_mag], axis=-1)

    cd = w1_ref.dtype                       # matmul input dtype (f32 or bf16)
    combined = _gelu(
        jnp.dot(x1.astype(cd), w1_ref[...], preferred_element_type=jnp.float32)
        + b1_ref[...],
        approx_gelu)
    out = (jnp.dot(combined.astype(cd), wc_ref[...],
                   preferred_element_type=jnp.float32)
           + bc_ref[...])
    out_ref[...] = (out * scale_ref[0]).astype(out_ref.dtype)


def _split_kernel(scale_ref,                       # SMEM (1,) f32
                  real_ref, imag_ref,              # VMEM (T, C)
                  wm_ref, bm_ref,                  # VMEM (C, Dh), (1, Dh)
                  wpr_ref, wpi_ref, bp_ref,        # VMEM (C, Dh), (C, Dh), (1, Dh)
                  wcm_ref, wcp_ref, bc_ref,        # VMEM (Dh, D), (Dh, D), (1, D)
                  out_ref,                         # VMEM (T, D)
                  *, approx_gelu):
    """Large-C path: per-branch GEMMs with pre-split weights (no in-kernel slicing)."""
    real = real_ref[...].astype(jnp.float32)
    imag = imag_ref[...].astype(jnp.float32)
    eps = jnp.float32(1e-6)

    sq = real * real + imag * imag + eps
    mag = jnp.sqrt(sq)
    inv_mag = jax.lax.rsqrt(sq)
    norm_real = real * inv_mag
    norm_imag = imag * inv_mag

    cd = wm_ref.dtype
    mag_feat = _gelu(
        jnp.dot(mag.astype(cd), wm_ref[...], preferred_element_type=jnp.float32)
        + bm_ref[...],
        approx_gelu)
    phase_feat = _gelu(
        jnp.dot(norm_real.astype(cd), wpr_ref[...], preferred_element_type=jnp.float32)
        + jnp.dot(norm_imag.astype(cd), wpi_ref[...], preferred_element_type=jnp.float32)
        + bp_ref[...],
        approx_gelu)
    out = (jnp.dot(mag_feat.astype(cd), wcm_ref[...], preferred_element_type=jnp.float32)
           + jnp.dot(phase_feat.astype(cd), wcp_ref[...], preferred_element_type=jnp.float32)
           + bc_ref[...])
    out_ref[...] = (out * scale_ref[0]).astype(out_ref.dtype)


# ----------------------------------------------------------------------------
# Wrapper
# ----------------------------------------------------------------------------
def _round_up(x, m):
    return ((x + m - 1) // m) * m


def _vmem_capacity_bytes():
    try:
        return int(pltpu.get_tpu_info().vmem_capacity_bytes)
    except Exception:
        return 64 << 20  # conservative (v7x per-TensorCore VMEM)


def hakmem_complex_to_real_projection(real, imag, params, *, tile_n=4096,
                                      weight_dtype=None, approx_gelu=False):
    """real, imag: (B, S, C) float32.  Returns (B, S, D) float32.

    weight_dtype=jnp.bfloat16 casts weights AND the intermediate activations
    feeding each GEMM to bf16 (f32 accumulation); element-wise math stays f32.
    """
    B, S, C = real.shape
    D = params["wc"].shape[0]
    Dh = D // 2
    N = B * S

    wdt = jnp.float32 if weight_dtype is None else weight_dtype
    packed = C <= 128   # pack the three K=C GEMMs into one K=3C GEMM

    bc = params["bc"].reshape(1, D).astype(jnp.float32)
    if packed:
        w1 = jnp.zeros((3 * C, D), jnp.float32)
        w1 = w1.at[:C, :Dh].set(params["wm"])
        w1 = w1.at[C:2 * C, Dh:].set(params["wp"][:C])
        w1 = w1.at[2 * C:, Dh:].set(params["wp"][C:])
        b1 = jnp.concatenate([params["bm"], params["bp"]]).reshape(1, D)
        weights = (w1.astype(wdt), b1.astype(jnp.float32),
                   params["wc"].astype(wdt), bc)
        kernel = functools.partial(_packed_kernel, approx_gelu=approx_gelu)
    else:
        weights = (params["wm"].astype(wdt),
                   params["bm"].reshape(1, Dh).astype(jnp.float32),
                   params["wp"][:C].astype(wdt),
                   params["wp"][C:].astype(wdt),
                   params["bp"].reshape(1, Dh).astype(jnp.float32),
                   params["wc"][:Dh].astype(wdt),
                   params["wc"][Dh:].astype(wdt),
                   bc)
        kernel = functools.partial(_split_kernel, approx_gelu=approx_gelu)

    # Hoisted scalar: kernel only does a broadcast multiply.
    scale = jax.nn.sigmoid(
        params["activation_scale"].reshape(1).astype(jnp.float32) + 1.0)

    real2 = real.reshape(N, C)   # no copy, no padding
    imag2 = imag.reshape(N, C)

    weight_bytes = sum(int(w.size) * w.dtype.itemsize for w in weights)
    vmem_budget = int(0.75 * _vmem_capacity_bytes())

    # Activation VMEM per row (f32): double-buffered real/imag, double-buffered
    # output, plus in-flight intermediates (X1 / features).
    per_row = 4 * (2 * (2 * C) + 2 * D + (3 * C + 2 * D))
    avail = max(vmem_budget - 3 * weight_bytes, 1 << 20)
    tile = min(int(tile_n), max(avail // per_row, 8))
    tile = max(8, (tile // 8) * 8)
    tile = min(tile, _round_up(N, 8))

    grid = (pl.cdiv(N, tile),)   # partial last block handled by Pallas masking

    # Grid-invariant weights: single-buffer them once they are big enough to
    # matter (second pipeline buffer is dead VMEM since the block never changes).
    single_buffer = weight_bytes > (4 << 20)

    def _wspec(shape):
        idx = lambda i, _n=len(shape): (0,) * _n
        if single_buffer:
            return pl.BlockSpec(shape, idx, pipeline_mode=pl.Buffered(1))
        return pl.BlockSpec(shape, idx)

    in_specs = [
        pl.BlockSpec(memory_space=pltpu.MemorySpace.SMEM),   # hoisted scale
        pl.BlockSpec((tile, C), lambda i: (i, 0)),           # real tile
        pl.BlockSpec((tile, C), lambda i: (i, 0)),           # imag tile
    ] + [_wspec(w.shape) for w in weights]

    out2 = pl.pallas_call(
        kernel,
        out_shape=jax.ShapeDtypeStruct((N, D), jnp.float32),
        grid=grid,
        in_specs=in_specs,
        out_specs=pl.BlockSpec((tile, D), lambda i: (i, 0)),
        compiler_params=pltpu.CompilerParams(
            dimension_semantics=("parallel",),
            vmem_limit_bytes=vmem_budget),
    )(scale, real2, imag2, *weights)

    return out2.reshape(B, S, D)


# ----------------------------------------------------------------------------
# Parameter init (matches the PyTorch module) and plain-JAX reference
# ----------------------------------------------------------------------------
def _xavier_uniform(key, fan_in, fan_out):
    # nn.init.xavier_uniform_ for a (fan_out, fan_in) torch weight; stored
    # transposed as (fan_in, fan_out).
    limit = math.sqrt(6.0 / (fan_in + fan_out))
    return jax.random.uniform(key, (fan_in, fan_out), jnp.float32, -limit, limit)


def init_params(key, complex_dim, output_dim):
    Dh = output_dim // 2
    k = jax.random.split(key, 6)
    return {
        "wm": _xavier_uniform(k[0], complex_dim, Dh),
        "bm": jax.random.uniform(k[1], (Dh,), jnp.float32, -0.1, 0.1),
        "wp": _xavier_uniform(k[2], 2 * complex_dim, Dh),
        "bp": jax.random.uniform(k[3], (Dh,), jnp.float32, -0.1, 0.1),
        "wc": _xavier_uniform(k[4], output_dim, output_dim),
        "bc": jax.random.uniform(k[5], (output_dim,), jnp.float32, -0.1, 0.1),
        "activation_scale": jnp.zeros((), jnp.float32),
    }


def _reference(real, imag, params):
    eps = 1e-6
    mag = jnp.sqrt(real ** 2 + imag ** 2 + eps)
    mag_feat = _gelu(mag @ params["wm"] + params["bm"], False)
    nr, ni = real / mag, imag / mag
    phase_in = jnp.concatenate([nr, ni], axis=-1)
    ph_feat = _gelu(phase_in @ params["wp"] + params["bp"], False)
    combined = jnp.concatenate([mag_feat, ph_feat], axis=-1)
    scale = jax.nn.sigmoid(params["activation_scale"] + 1.0)
    return (combined @ params["wc"] + params["bc"]) * scale


if __name__ == "__main__":
    key = jax.random.PRNGKey(0)

    def _run_case(case_key, B, S, C, D):
        k_r, k_i, k_p = jax.random.split(case_key, 3)
        params = init_params(k_p, C, D)
        real = jax.random.normal(k_r, (B, S, C), jnp.float32)
        imag = jax.random.normal(k_i, (B, S, C), jnp.float32)
        out = jax.block_until_ready(
            hakmem_complex_to_real_projection(real, imag, params))
        ref = _reference(real, imag, params)
        assert out.shape == (B, S, D)
        err = float(jnp.max(jnp.abs(out - ref)))
        assert err < 1e-4, f"mismatch vs plain-JAX reference: {err}"

    keys = jax.random.split(key, 3)
    _run_case(keys[0], 2, 8, 32, 64)    # packed path, N divisible by 8
    _run_case(keys[1], 3, 5, 32, 64)    # packed path, ragged N (partial block)
    _run_case(keys[2], 2, 8, 160, 64)   # split path (C > 128)

    print("KERNEL_OK")
</pallas_src>

<mosaic_0001>
module attributes {stable_mosaic.version = 11 : i64} {
  func.func @_packed_kernel(%arg0: i32, %arg1: memref<1xf32, #tpu.memory_space<smem>>, %arg2: memref<16x32xf32, #tpu.memory_space<vmem>>, %arg3: memref<16x32xf32, #tpu.memory_space<vmem>>, %arg4: memref<96x64xf32, #tpu.memory_space<vmem>>, %arg5: memref<1x64xf32, #tpu.memory_space<vmem>>, %arg6: memref<64x64xf32, #tpu.memory_space<vmem>>, %arg7: memref<1x64xf32, #tpu.memory_space<vmem>>, %arg8: memref<16x64xf32, #tpu.memory_space<vmem>>) attributes {dimension_semantics = [#tpu.dimension_semantics<parallel>], iteration_bounds = array<i64: 1>, scalar_prefetch = 0 : i64, scratch_operands = 0 : i64, tpu.core_type = #tpu.core_type<tc>, window_params = [{transform_indices = @transform_0, window_bounds = array<i64: 1>}, {transform_indices = @transform_1, window_bounds = array<i64: 16, 32>}, {transform_indices = @transform_2, window_bounds = array<i64: 16, 32>}, {pipeline_mode = #tpu.pipeline_mode<synchronous>, transform_indices = @transform_3, window_bounds = array<i64: 96, 64>}, {pipeline_mode = #tpu.pipeline_mode<synchronous>, transform_indices = @transform_4, window_bounds = array<i64: 1, 64>}, {pipeline_mode = #tpu.pipeline_mode<synchronous>, transform_indices = @transform_5, window_bounds = array<i64: 64, 64>}, {pipeline_mode = #tpu.pipeline_mode<synchronous>, transform_indices = @transform_6, window_bounds = array<i64: 1, 64>}, {transform_indices = @transform_7, window_bounds = array<i64: 16, 64>}]} {
    %c0 = arith.constant 0 : index
    %c0_0 = arith.constant 0 : index
    %0 = vector.load %arg2[%c0, %c0_0] : memref<16x32xf32, #tpu.memory_space<vmem>>, vector<16x32xf32>
    %c0_1 = arith.constant 0 : index
    %c0_2 = arith.constant 0 : index
    %1 = vector.load %arg3[%c0_1, %c0_2] : memref<16x32xf32, #tpu.memory_space<vmem>>, vector<16x32xf32>
    %2 = arith.mulf %0, %0 : vector<16x32xf32>
    %3 = arith.mulf %1, %1 : vector<16x32xf32>
    %4 = arith.addf %2, %3 : vector<16x32xf32>
    %cst = arith.constant 9.99999997E-7 : f32
    %5 = vector.broadcast %cst : f32 to vector<16x32xf32>
    %6 = arith.addf %4, %5 : vector<16x32xf32>
    %7 = math.sqrt %6 : vector<16x32xf32>
    %8 = math.rsqrt %6 : vector<16x32xf32>
    %9 = arith.mulf %0, %8 : vector<16x32xf32>
    %10 = arith.mulf %1, %8 : vector<16x32xf32>
    %11 = tpu.concatenate %7, %9, %10 in 1 : vector<16x32xf32>, vector<16x32xf32>, vector<16x32xf32> -> vector<16x96xf32>
    %c0_3 = arith.constant 0 : index
    %c0_4 = arith.constant 0 : index
    %12 = vector.load %arg4[%c0_3, %c0_4] : memref<96x64xf32, #tpu.memory_space<vmem>>, vector<96x64xf32>
    %cst_5 = arith.constant dense<0.000000e+00> : vector<16x64xf32>
    %13 = tpu.matmul %11, %12, %cst_5 {dimension_numbers = #tpu.dot_dimension_numbers<[1], [0], [0], [1], [0, 0, 1, 1], [], []>} : vector<16x96xf32>, vector<96x64xf32>, vector<16x64xf32> -> vector<16x64xf32>
    %c0_6 = arith.constant 0 : index
    %c0_7 = arith.constant 0 : index
    %14 = vector.load %arg5[%c0_6, %c0_7] : memref<1x64xf32, #tpu.memory_space<vmem>>, vector<1x64xf32>
    %15 = vector.broadcast %14 : vector<1x64xf32> to vector<16x64xf32>
    %16 = arith.addf %13, %15 : vector<16x64xf32>
    %cst_8 = arith.constant 5.000000e-01 : f32
    %17 = vector.broadcast %cst_8 : f32 to vector<16x64xf32>
    %18 = arith.mulf %17, %16 : vector<16x64xf32>
    %cst_9 = arith.constant 0.707106769 : f32
    %19 = vector.broadcast %cst_9 : f32 to vector<16x64xf32>
    %20 = arith.mulf %16, %19 : vector<16x64xf32>
    %21 = math.erf %20 : vector<16x64xf32>
    %cst_10 = arith.constant 1.000000e+00 : f32
    %22 = vector.broadcast %cst_10 : f32 to vector<16x64xf32>
    %23 = arith.addf %22, %21 : vector<16x64xf32>
    %24 = arith.mulf %18, %23 : vector<16x64xf32>
    %c0_11 = arith.constant 0 : index
    %c0_12 = arith.constant 0 : index
    %25 = vector.load %arg6[%c0_11, %c0_12] : memref<64x64xf32, #tpu.memory_space<vmem>>, vector<64x64xf32>
    %cst_13 = arith.constant dense<0.000000e+00> : vector<16x64xf32>
    %26 = tpu.matmul %24, %25, %cst_13 {dimension_numbers = #tpu.dot_dimension_numbers<[1], [0], [0], [1], [0, 0, 1, 1], [], []>} : vector<16x64xf32>, vector<64x64xf32>, vector<16x64xf32> -> vector<16x64xf32>
    %c0_14 = arith.constant 0 : index
    %c0_15 = arith.constant 0 : index
    %27 = vector.load %arg7[%c0_14, %c0_15] : memref<1x64xf32, #tpu.memory_space<vmem>>, vector<1x64xf32>
    %28 = vector.broadcast %27 : vector<1x64xf32> to vector<16x64xf32>
    %29 = arith.addf %26, %28 : vector<16x64xf32>
    %c0_16 = arith.constant 0 : index
    %30 = memref.load %arg1[%c0_16] : memref<1xf32, #tpu.memory_space<smem>>
    %31 = vector.broadcast %30 : f32 to vector<16x64xf32>
    %32 = arith.mulf %29, %31 : vector<16x64xf32>
    %c0_17 = arith.constant 0 : index
    %c0_18 = arith.constant 0 : index
    %33 = vector.load %arg8[%c0_17, %c0_18] : memref<16x64xf32, #tpu.memory_space<vmem>>, vector<16x64xf32>
    tpu.vector_store %arg8[%c0_17, %c0_18], %32 {strides = array<i32>} : memref<16x64xf32, #tpu.memory_space<vmem>>, vector<16x64xf32>,
    return
  }
  func.func @transform_0(%arg0: i32) -> i32 {
    %c0_i32 = arith.constant 0 : i32
    %c0_i32_0 = arith.constant 0 : i32
    return %c0_i32 : i32
  }
  func.func @transform_1(%arg0: i32) -> (i32, i32) {
    %c0_i32 = arith.constant 0 : i32
    %c0_i32_0 = arith.constant 0 : i32
    return %arg0, %c0_i32 : i32, i32
  }
  func.func @transform_2(%arg0: i32) -> (i32, i32) {
    %c0_i32 = arith.constant 0 : i32
    %c0_i32_0 = arith.constant 0 : i32
    return %arg0, %c0_i32 : i32, i32
  }
  func.func @transform_3(%arg0: i32) -> (i32, i32) {
    %c0_i32 = arith.constant 0 : i32
    %c0_i32_0 = arith.constant 0 : i32
    %c0_i32_1 = arith.constant 0 : i32
    return %c0_i32, %c0_i32_0 : i32, i32
  }
  func.func @transform_4(%arg0: i32) -> (i32, i32) {
    %c0_i32 = arith.constant 0 : i32
    %c0_i32_0 = arith.constant 0 : i32
    %c0_i32_1 = arith.constant 0 : i32
    return %c0_i32, %c0_i32_0 : i32, i32
  }
  func.func @transform_5(%arg0: i32) -> (i32, i32) {
    %c0_i32 = arith.constant 0 : i32
    %c0_i32_0 = arith.constant 0 : i32
    %c0_i32_1 = arith.constant 0 : i32
    return %c0_i32, %c0_i32_0 : i32, i32
  }
  func.func @transform_6(%arg0: i32) -> (i32, i32) {
    %c0_i32 = arith.constant 0 : i32
    %c0_i32_0 = arith.constant 0 : i32
    %c0_i32_1 = arith.constant 0 : i32
    return %c0_i32, %c0_i32_0 : i32, i32
  }
  func.func @transform_7(%arg0: i32) -> (i32, i32) {
    %c0_i32 = arith.constant 0 : i32
    %c0_i32_0 = arith.constant 0 : i32
    return %arg0, %c0_i32 : i32, i32
  }
}

</mosaic_0001>

<llo_original>
// kernel: tpu_custom_call.1
$region0: #{tpu_custom_call.1}
  #allocation0 [shape = 'u32[]', space=smem, size = 0x4, offset = 0x4, fixed_abs, tag = 'smem constant byte address 0x4 - core index']
  #allocation1 [shape = 'u32[144,128]{1,0:T(1,128)}', space=vmem, size = 0x12000, scoped, tag = 'internal scratch']
  #allocation2 [shape = 'f32[1]{0:T(128)S(6)}', space=smem, size = 0x200, scoped, tag = 'scoped memory for tpu_custom_call.1']
  %s0 = inlined_call_operand.<no memory space> [shape: f32[1], index: 0, kind: input, shape index: {}]
  %s1 = inlined_call_operand.vmem [shape: f32[16,32], index: 1, kind: input, shape index: {}]
  %s2 = inlined_call_operand.vmem [shape: f32[16,32], index: 2, kind: input, shape index: {}]
  %s3 = inlined_call_operand.vmem [shape: f32[96,64], index: 3, kind: input, shape index: {}]
  %s4 = inlined_call_operand.vmem [shape: f32[1,64], index: 4, kind: input, shape index: {}]
  %s5 = inlined_call_operand.vmem [shape: f32[64,64], index: 5, kind: input, shape index: {}]
  %s6 = inlined_call_operand.vmem [shape: f32[1,64], index: 6, kind: input, shape index: {}]
  %s7 = inlined_call_operand.hbm [shape: f32[16,64], index: 7, kind: output, shape index: {}]
  %s8 = sld [smem:[#allocation0]]
  $region38: #{tpu_custom_call.1} parent=0
    _
  %s10 = ssub.s32 1, %s8
  %s11 = scalar_select 0, %s10, %s8
  %12 = sst [smem:[#allocation2]] %s0
  $region1: #{tpu_custom_call.1} parent=0
    #allocation3 [shape = 'u8[8192]{0}', space=vmem, size = 0x2000, scoped, tag = 'output window, operand 0, single buffered']
    #allocation4 [shape = 's32[1]{0}', space=sflag, size = 0x4, scoped, tag = 'scoped memory for tpu_custom_call.1']
    %13 = vsyncpa [#allocation4], 0
    // Predicated region
    $region2: #{tpu_custom_call.1} parent=1 // pred_check
      _
    $region3: #{tpu_custom_call.1} parent=1 // pred_check_branch
      %15 = sbr.rel (0) target = $region5
    $region4: #{tpu_custom_call.1} parent=1 // pred_region
      _
    $region5: #{tpu_custom_call.1} parent=1 // pred_fallthru
      _
    // Predicated region
    $region6: #{tpu_custom_call.1} parent=1 // pred_check
      _
    $region7: #{tpu_custom_call.1} parent=1 // pred_check_branch
      %17 = sbr.rel (0) target = $region9
    $region8: #{tpu_custom_call.1} parent=1 // pred_region
      _
    $region9: #{tpu_custom_call.1} parent=1 // pred_fallthru
      _
    // Predicated region
    $region10: #{tpu_custom_call.1} parent=1 // pred_check
      _
    $region11: #{tpu_custom_call.1} parent=1 // pred_check_branch
      %19 = sbr.rel (0) target = $region13
    $region12: #{tpu_custom_call.1} parent=1 // pred_region
      _
    $region13: #{tpu_custom_call.1} parent=1 // pred_fallthru
      _
    // Predicated region
    $region14: #{tpu_custom_call.1} parent=1 // pred_check
      _
    $region15: #{tpu_custom_call.1} parent=1 // pred_check_branch
      %21 = sbr.rel (0) target = $region17
    $region16: #{tpu_custom_call.1} parent=1 // pred_region
      _
    $region17: #{tpu_custom_call.1} parent=1 // pred_fallthru
      _
    // Predicated region
    $region18: #{tpu_custom_call.1} parent=1 // pred_check
      _
    $region19: #{tpu_custom_call.1} parent=1 // pred_check_branch
      %23 = sbr.rel (0) target = $region21
    $region20: #{tpu_custom_call.1} parent=1 // pred_region
      _
    $region21: #{tpu_custom_call.1} parent=1 // pred_fallthru
      _
    // Predicated region
    $region22: #{tpu_custom_call.1} parent=1 // pred_check
      _
    $region23: #{tpu_custom_call.1} parent=1 // pred_check_branch
      %25 = sbr.rel (0) target = $region25
    $region24: #{tpu_custom_call.1} parent=1 // pred_region
      _
    $region25: #{tpu_custom_call.1} parent=1 // pred_fallthru
      _
    // Predicated region
    $region26: #{tpu_custom_call.1} parent=1 // pred_check
      _
    $region27: #{tpu_custom_call.1} parent=1 // pred_check_branch
      %27 = sbr.rel (0) target = $region29
    $region28: #{tpu_custom_call.1} parent=1 // pred_region
      _
    $region29: #{tpu_custom_call.1} parent=1 // pred_fallthru
      _
    %v28 = vld [vmem:[%s1] sm:$0xff]
    %v29 = vld [vmem:[%s1 + $0x8] sm:$0xff]
    %v30 = vld [vmem:[%s2] sm:$0xff]
    %v31 = vld [vmem:[%s2 + $0x8] sm:$0xff]
    %v32 = vmul.f32 %v28, %v28
    %v33 = vmul.f32 %v29, %v29
    %v34 = vmul.f32 %v30, %v30
    %v35 = vmul.f32 %v31, %v31
    %v36 = vadd.f32 %v32, %v34
    %v37 = vadd.f32 %v33, %v35
    %v38 = vadd.f32 %v36, 1e-06
    %v39 = vadd.f32 %v37, 1e-06
    %v40 = vrsqrt.pop %v38
    %v41 = vmul.f32 %v38, %v40
    %vm42 = vcmp.eq.f32.partialorder %v38, inf
    %v43 = vsel %vm42, %v38, %v41
    %vm44 = vcmp.eq.f32.partialorder %v38, 0.0
    %v45 = vand.u32 %v38, 2147483648
    %v46 = vsel %vm44, %v45, %v43
    %v47 = vrsqrt.pop %v39
    %v48 = vmul.f32 %v39, %v47
    %vm49 = vcmp.eq.f32.partialorder %v39, inf
    %v50 = vsel %vm49, %v39, %v48
    %vm51 = vcmp.eq.f32.partialorder %v39, 0.0
    %v52 = vand.u32 %v39, 2147483648
    %v53 = vsel %vm51, %v52, %v50
    %v54 = vrsqrt.pop %v38
    %v55 = vrsqrt.pop %v39
    %v56 = vmul.f32 %v28, %v54
    %v57 = vmul.f32 %v29, %v55
    %v58 = vmul.f32 %v30, %v54
    %v59 = vmul.f32 %v31, %v55
    %62 = vrot.lane.b32.xlu0 %v56, 32
    %v63 = vpop.permute.xlu0 %62
    %64 = vrot.lane.b32.xlu0 %v57, 32
    %v65 = vpop.permute.xlu0 %64
    %70 = vrot.lane.b32.xlu0 %v58, 64
    %v71 = vpop.permute.xlu0 %70
    %72 = vrot.lane.b32.xlu0 %v59, 64
    %v73 = vpop.permute.xlu0 %72
    %vm76 = vcmask 261120
    %v77 = vsel %vm76, %v46, %v63
    %v78 = vsel %vm76, %v53, %v65
    %vm79 = vcmask 523264
    %v80 = vsel %vm79, %v77, %v71
    %v81 = vsel %vm79, %v78, %v73
    %v82 = vld [vmem:[%s3] sm:$0xff]
    %v83 = vld [vmem:[%s3 + $0x8] sm:$0xff]
    %v84 = vld [vmem:[%s3 + $0x10] sm:$0xff]
    %v85 = vld [vmem:[%s3 + $0x18] sm:$0xff]
    %v86 = vld [vmem:[%s3 + $0x20] sm:$0xff]
    %v87 = vld [vmem:[%s3 + $0x28] sm:$0xff]
    %v88 = vld [vmem:[%s3 + $0x30] sm:$0xff]
    %v89 = vld [vmem:[%s3 + $0x38] sm:$0xff]
    %v90 = vld [vmem:[%s3 + $0x40] sm:$0xff]
    %v91 = vld [vmem:[%s3 + $0x48] sm:$0xff]
    %v92 = vld [vmem:[%s3 + $0x50] sm:$0xff]
    %v93 = vld [vmem:[%s3 + $0x58] sm:$0xff]
    %v94 = vld [vmem:[%s4] sm:$0x1]
    %v96 = vlaneseq
    %v97 = vshrl.u32 %v96, 7
    %v98 = vsub.s32 0, %v97
    %v99 = vrot.slane %v94, %v98
    %vm101 = vcmask 785408
    %v103 = vsel %vm101, %v80, 0
    %v106 = vsel %vm101, %v81, 0
    %108 = vmatprep.subr.mxu0 0.0
    %109 = vmatpush1.msra.mxu0 %v82
    %110 = vmatprep.subr.mxu0 0.0
    %111 = vmatpush1.msra.mxu0 %v83
    %112 = vmatprep.subr.mxu0 0.0
    %113 = vmatpush1.msra.mxu0 %v84
    %114 = vmatprep.subr.mxu0 0.0
    %115 = vmatpush1.msra.mxu0 %v85
    %116 = vmatprep.subr.mxu0 0.0
    %117 = vmatpush1.msra.mxu0 %v86
    %118 = vmatprep.subr.mxu0 0.0
    %119 = vmatpush1.msra.mxu0 %v87
    %120 = vmatprep.subr.mxu0 0.0
    %121 = vmatpush1.msra.mxu0 %v88
    %122 = vmatprep.subr.mxu0 0.0
    %123 = vmatpush1.msra.mxu0 %v89
    %124 = vmatprep.subr.mxu0 0.0
    %125 = vmatpush1.msra.mxu0 %v90
    %126 = vmatprep.subr.mxu0 0.0
    %127 = vmatpush1.msra.mxu0 %v91
    %128 = vmatprep.subr.mxu0 0.0
    %129 = vmatpush1.msra.mxu0 %v92
    %130 = vmatprep.subr.mxu0 0.0
    %131 = vmatpush1.msra.mxu0 %v93
    %132 = vmatprep.subr.mxu0 0.0
    %133 = vmatpush1.msra.mxu0 0.0
    %134 = vmatprep.subr.mxu0 0.0
    %135 = vmatpush1.msra.mxu0 0.0
    %136 = vmatprep.subr.mxu0 0.0
    %137 = vmatpush1.msra.mxu0 0.0
    %138 = vmatprep.subr.mxu0 0.0
    %139 = vmatpush1.msra.mxu0 0.0
    %140 = vmatprep.subr.mxu0 0.0
    %141 = vmatpush1.msra.mxu0 0.0
    %142 = vmatprep.subr.mxu0 0.0
    %143 = vmatpush1.msra.mxu0 0.0
    %144 = vmatprep.subr.mxu0 0.0
    %145 = vmatpush1.msra.mxu0 0.0
    %146 = vmatprep.subr.mxu0 0.0
    %147 = vmatpush1.msra.mxu0 0.0
    %148 = vmatprep.subr.mxu0 0.0
    %149 = vmatpush1.msra.mxu0 0.0
    %150 = vmatprep.subr.mxu0 0.0
    %151 = vmatpush1.msra.mxu0 0.0
    %152 = vmatprep.subr.mxu0 0.0
    %153 = vmatpush1.msra.mxu0 0.0
    %154 = vmatprep.subr.mxu0 0.0
    %155 = vmatpush1.msra.mxu0 0.0
    %156 = vmatprep.subr.mxu0 0.0
    %157 = vmatpush1.msra.mxu0 0.0
    %158 = vmatprep.subr.mxu0 0.0
    %159 = vmatpush1.msra.mxu0 0.0
    %160 = vmatprep.subr.mxu0 0.0
    %161 = vmatpush1.msra.mxu0 0.0
    %162 = vmatprep.subr.mxu0 0.0
    %163 = vmatpush1.msra.mxu0 0.0
    %164 = vmatprep.subr.mxu0 0.0
    %165 = vmatpush1.msra.mxu0 0.0
    %166 = vmatprep.subr.mxu0 0.0
    %167 = vmatpush1.msra.mxu0 0.0
    %168 = vmatprep.subr.mxu0 0.0
    %169 = vmatpush1.msra.mxu0 0.0
    %170 = vmatprep.subr.mxu0 0.0
    %171 = vmatpush1.msra.mxu0 0.0
    %172 = vmatprep.mubr.f32.mxu0 0.0
    %173 = vmatmul.mubr.f32.gmra.mrb[0].mxu0 %v103
    %v174 = vpop.f32.mrb[0].mxu0
    %v175 = vadd.f32 %v99, %v174
    %v176 = vpop.f32.mrb[0].mxu0
    %177 = vmatprep.mubr.f32.mxu0 0.0
    %178 = vmatmul.mubr.f32.gmra.mrb[0].mxu0 %v106
    %v179 = vpop.f32.mrb[0].mxu0
    %v180 = vadd.f32 %v99, %v179
    %v181 = vpop.f32.mrb[0].mxu0
    %182 = vdwg.mxu0
    %v183 = vmul.f32 %v175, 0.5
    %v184 = vmul.f32 %v180, 0.5
    %v185 = vmul.f32 %v175, 0.70710677
    %v186 = vmul.f32 %v180, 0.70710677
    %v187 = verf.f32.pop %v185
    %v188 = verf.f32.pop %v186
    %v189 = vadd.f32 %v187, 1.0
    %v190 = vadd.f32 %v188, 1.0
    %v191 = vmul.f32 %v183, %v189
    %v192 = vmul.f32 %v184, %v190
    %v193 = vld [vmem:[%s5] sm:$0xff]
    %v194 = vld [vmem:[%s5 + $0x8] sm:$0xff]
    %v195 = vld [vmem:[%s5 + $0x10] sm:$0xff]
    %v196 = vld [vmem:[%s5 + $0x18] sm:$0xff]
    %v197 = vld [vmem:[%s5 + $0x20] sm:$0xff]
    %v198 = vld [vmem:[%s5 + $0x28] sm:$0xff]
    %v199 = vld [vmem:[%s5 + $0x30] sm:$0xff]
    %v200 = vld [vmem:[%s5 + $0x38] sm:$0xff]
    %v201 = vld [vmem:[%s6] sm:$0x1]
    %v203 = vlaneseq
    %v204 = vshrl.u32 %v203, 7
    %v205 = vsub.s32 0, %v204
    %v206 = vrot.slane %v201, %v205
    %v209 = vsel %vm79, %v191, 0
    %v212 = vsel %vm79, %v192, 0
    %214 = vmatprep.subr.mxu0 0.0
    %215 = vmatpush1.msra.mxu0 %v193
    %216 = vmatprep.subr.mxu0 0.0
    %217 = vmatpush1.msra.mxu0 %v194
    %218 = vmatprep.subr.mxu0 0.0
    %219 = vmatpush1.msra.mxu0 %v195
    %220 = vmatprep.subr.mxu0 0.0
    %221 = vmatpush1.msra.mxu0 %v196
    %222 = vmatprep.subr.mxu0 0.0
    %223 = vmatpush1.msra.mxu0 %v197
    %224 = vmatprep.subr.mxu0 0.0
    %225 = vmatpush1.msra.mxu0 %v198
    %226 = vmatprep.subr.mxu0 0.0
    %227 = vmatpush1.msra.mxu0 %v199
    %228 = vmatprep.subr.mxu0 0.0
    %229 = vmatpush1.msra.mxu0 %v200
    %230 = vmatprep.subr.mxu0 0.0
    %231 = vmatpush1.msra.mxu0 0.0
    %232 = vmatprep.subr.mxu0 0.0
    %233 = vmatpush1.msra.mxu0 0.0
    %234 = vmatprep.subr.mxu0 0.0
    %235 = vmatpush1.msra.mxu0 0.0
    %236 = vmatprep.subr.mxu0 0.0
    %237 = vmatpush1.msra.mxu0 0.0
    %238 = vmatprep.subr.mxu0 0.0
    %239 = vmatpush1.msra.mxu0 0.0
    %240 = vmatprep.subr.mxu0 0.0
    %241 = vmatpush1.msra.mxu0 0.0
    %242 = vmatprep.subr.mxu0 0.0
    %243 = vmatpush1.msra.mxu0 0.0
    %244 = vmatprep.subr.mxu0 0.0
    %245 = vmatpush1.msra.mxu0 0.0
    %246 = vmatprep.subr.mxu0 0.0
    %247 = vmatpush1.msra.mxu0 0.0
    %248 = vmatprep.subr.mxu0 0.0
    %249 = vmatpush1.msra.mxu0 0.0
    %250 = vmatprep.subr.mxu0 0.0
    %251 = vmatpush1.msra.mxu0 0.0
    %252 = vmatprep.subr.mxu0 0.0
    %253 = vmatpush1.msra.mxu0 0.0
    %254 = vmatprep.subr.mxu0 0.0
    %255 = vmatpush1.msra.mxu0 0.0
    %256 = vmatprep.subr.mxu0 0.0
    %257 = vmatpush1.msra.mxu0 0.0
    %258 = vmatprep.subr.mxu0 0.0
    %259 = vmatpush1.msra.mxu0 0.0
    %260 = vmatprep.subr.mxu0 0.0
    %261 = vmatpush1.msra.mxu0 0.0
    %262 = vmatprep.subr.mxu0 0.0
    %263 = vmatpush1.msra.mxu0 0.0
    %264 = vmatprep.subr.mxu0 0.0
    %265 = vmatpush1.msra.mxu0 0.0
    %266 = vmatprep.subr.mxu0 0.0
    %267 = vmatpush1.msra.mxu0 0.0
    %268 = vmatprep.subr.mxu0 0.0
    %269 = vmatpush1.msra.mxu0 0.0
    %270 = vmatprep.subr.mxu0 0.0
    %271 = vmatpush1.msra.mxu0 0.0
    %272 = vmatprep.subr.mxu0 0.0
    %273 = vmatpush1.msra.mxu0 0.0
    %274 = vmatprep.subr.mxu0 0.0
    %275 = vmatpush1.msra.mxu0 0.0
    %276 = vmatprep.subr.mxu0 0.0
    %277 = vmatpush1.msra.mxu0 0.0
    %278 = vmatprep.mubr.f32.mxu0 0.0
    %279 = vmatmul.mubr.f32.gmra.mrb[0].mxu0 %v209
    %v280 = vpop.f32.mrb[0].mxu0
    %v281 = vadd.f32 %v206, %v280
    %v282 = vpop.f32.mrb[0].mxu0
    %283 = vmatprep.mubr.f32.mxu0 0.0
    %284 = vmatmul.mubr.f32.gmra.mrb[0].mxu0 %v212
    %v285 = vpop.f32.mrb[0].mxu0
    %v286 = vadd.f32 %v206, %v285
    %v287 = vpop.f32.mrb[0].mxu0
    %288 = vdwg.mxu0
    %s289 = sld [smem:[#allocation2]]
    %v290 = vstv %s289
    %v291 = vmul.f32 %v281, %v290
    %v292 = vmul.f32 %v286, %v290
    %293 = vst.msk [vmem:[#allocation3] sm:$0xff] %vm79, %v291
    %294 = vst.msk [vmem:[#allocation3 + $0x8] sm:$0xff] %vm79, %v292
    // Predicated region
    $region30: #{tpu_custom_call.1} parent=1 // pred_check
      _
    $region31: #{tpu_custom_call.1} parent=1 // pred_check_branch
      %296 = sbr.rel (0) target = $region33
    $region32: #{tpu_custom_call.1} parent=1 // pred_region
      %s298 = ssub.s32 256, 256
      %299 = vsyncadd [#allocation4], %s298
      %s300 = sshll.u32 [#allocation3], 4
      %s301 = int_to_ptr.vmem [resolvable:$true] %s300
      %306 = dma.vmem_to_hbm [thread:$0]  %s301, 256, %s7, [#allocation4], 128, 128, 8
    $region33: #{tpu_custom_call.1} parent=1 // pred_fallthru
      _
    // Predicated region
    $region34: #{tpu_custom_call.1} parent=1 // pred_check
      _
    $region35: #{tpu_custom_call.1} parent=1 // pred_check_branch
      %308 = sbr.rel (0) target = $region37
    $region36: #{tpu_custom_call.1} parent=1 // pred_region
      %309 = dma.done [#allocation4], 256
    $region37: #{tpu_custom_call.1} parent=1 // pred_fallthru
      _
    %310 = vsyncpa [#allocation4], 1

</llo_original>
